<compile_context>
chip_gen: v6e
topology: v6e:2x2x1
jax: 0.10.0
libtpu: 0.0.40
codegen_flags: <defaults>
</compile_context>

<pallas_src>
import functools

import jax
import jax.numpy as jnp
from jax.experimental import pallas as pl
from jax.experimental.pallas import tpu as pltpu


def _acc_shape(hw):
    # Accumulator kept vector-shaped: (8, 128) when the flattened plane is a
    # multiple of 128 lanes, otherwise (8, hw).
    return (8, 128) if hw % 128 == 0 else (8, hw)


def _partial_reduce(d):
    """Reduce (P, HW) -> accumulator shape using only aligned static slices.

    Sublane groups of 8 and lane groups of 128 are summed with plain vreg
    adds (VPU), so no cross-lane XLU work happens per grid step.
    """
    p, hw = d.shape
    part = d[0:8]
    for g in range(1, p // 8):
        part = part + d[g * 8:(g + 1) * 8]
    if hw % 128 == 0 and hw > 128:
        out = part[:, 0:128]
        for g in range(1, hw // 128):
            out = out + part[:, g * 128:(g + 1) * 128]
        return out
    return part


def _tv_kernel(x_ref, h_out_ref, w_out_ref, acc_h_ref, acc_w_ref, *, h, w):
    # x_ref: (P, H*W) block of flattened spatial planes (one plane per row).
    step = pl.program_id(1)

    @pl.when(step == 0)
    def _():
        acc_h_ref[...] = jnp.zeros_like(acc_h_ref)
        acc_w_ref[...] = jnp.zeros_like(acc_w_ref)

    x = x_ref[...].astype(jnp.float32)
    p, hw = x.shape

    col = jax.lax.broadcasted_iota(jnp.int32, (p, hw), 1)

    # Height (row) differences: neighbour at +w in the flattened plane.
    # pltpu.roll matches jnp.roll semantics: roll by hw - w == roll by -w,
    # i.e. xh[i] = x[(i + w) % hw].  Valid positions: i < (h - 1) * w.
    xh = pltpu.roll(x, hw - w, 1)
    dh = jnp.where(col < (h - 1) * w, xh - x, 0.0)

    # Width (column) differences: neighbour at +1 in the flattened plane.
    # xw[i] = x[(i + 1) % hw].  Valid positions: i % w != w - 1.
    xw = pltpu.roll(x, hw - 1, 1)
    dw = jnp.where(col % w != w - 1, xw - x, 0.0)

    acc_h_ref[...] += _partial_reduce(dh * dh)
    acc_w_ref[...] += _partial_reduce(dw * dw)

    # Single expensive cross-lane reduce + output store, only on the last step.
    @pl.when(step == pl.num_programs(1) - 1)
    def _():
        h_out_ref[...] = jnp.sum(acc_h_ref[...], keepdims=True)
        w_out_ref[...] = jnp.sum(acc_w_ref[...], keepdims=True)


def tv_loss(x, tv_loss_weight=1.0, *, block_bytes=8 * 1024 * 1024):
    """Pallas TPU implementation of TVLoss.forward for NCHW input x."""
    B, C, H, W = x.shape
    BC, HW = B * C, H * W

    # Planes per grid step: multiple of 8, sized to the VMEM block budget
    # (the pipeline double-buffers this block).
    # TODO(synk): tile along H with a 1-row halo for planes larger than the
    # VMEM block budget (whole-plane blocks are assumed to fit here).
    plane_bytes = max(HW * x.dtype.itemsize, 1)
    max_p = max(8, (block_bytes // plane_bytes) // 8 * 8)
    p = min(max_p, -(-BC // 8) * 8)          # round BC up to a multiple of 8
    num_blocks = -(-BC // p)                 # ceil(BC / p)

    # Split the plane stream across TensorCores when there is more than one
    # block of work (v7x megacore); sequential and harmless on 1-TC chips.
    ncores = 2 if num_blocks >= 2 else 1
    steps = -(-num_blocks // ncores)
    bc_pad = ncores * steps * p

    x2 = x.reshape(BC, HW)
    if bc_pad != BC:
        # Zero-padded planes contribute 0 to both sums (diffs are per plane).
        x2 = jnp.pad(x2, ((0, bc_pad - BC), (0, 0)))

    acc_shape = _acc_shape(HW)

    h_part, w_part = pl.pallas_call(
        functools.partial(_tv_kernel, h=H, w=W),
        out_shape=(
            jax.ShapeDtypeStruct((ncores, 1, 1), jnp.float32),
            jax.ShapeDtypeStruct((ncores, 1, 1), jnp.float32),
        ),
        grid_spec=pltpu.PrefetchScalarGridSpec(
            num_scalar_prefetch=0,
            grid=(ncores, steps),
            in_specs=[
                pl.BlockSpec((p, HW), lambda c, i: (c * steps + i, 0)),
            ],
            out_specs=[
                pl.BlockSpec((None, 1, 1), lambda c, i: (c, 0, 0)),
                pl.BlockSpec((None, 1, 1), lambda c, i: (c, 0, 0)),
            ],
            scratch_shapes=[
                pltpu.VMEM(acc_shape, jnp.float32),
                pltpu.VMEM(acc_shape, jnp.float32),
            ],
        ),
        compiler_params=pltpu.CompilerParams(
            dimension_semantics=("parallel", "arbitrary"),
            vmem_limit_bytes=48 * 1024 * 1024,
        ),
        cost_estimate=pl.CostEstimate(
            flops=6 * BC * HW,
            transcendentals=0,
            bytes_accessed=int(x.size) * x.dtype.itemsize + 8 * ncores,
        ),
    )(x2)

    # Cheap scalar glue: combine per-core partials and normalize exactly like
    # the PyTorch module.
    count_h = C * (H - 1) * W
    count_w = C * H * (W - 1)
    h_sum = jnp.sum(h_part)
    w_sum = jnp.sum(w_part)
    return tv_loss_weight * 2.0 * (h_sum / count_h + w_sum / count_w) / B


def tv_loss_ref(x, tv_loss_weight=1.0):
    """Pure-JAX reference, mirrors the PyTorch module exactly."""
    B, C, H, W = x.shape
    count_h = C * (H - 1) * W
    count_w = C * H * (W - 1)
    h_tv = jnp.sum((x[:, :, 1:, :] - x[:, :, : H - 1, :]) ** 2)
    w_tv = jnp.sum((x[:, :, :, 1:] - x[:, :, :, : W - 1]) ** 2)
    return tv_loss_weight * 2.0 * (h_tv / count_h + w_tv / count_w) / B


if __name__ == "__main__":
    key = jax.random.PRNGKey(0)
    # small NCHW input: batch=2, channels=4, spatial=16x16
    x = jax.random.normal(key, (2, 4, 16, 16), dtype=jnp.float32)

    out = tv_loss(x, tv_loss_weight=1.0)
    out = jax.block_until_ready(out)

    ref = tv_loss_ref(x, tv_loss_weight=1.0)
    assert jnp.allclose(out, ref, rtol=1e-5, atol=1e-5), (out, ref)

    print("KERNEL_OK")
</pallas_src>

<mosaic_0001>
module attributes {stable_mosaic.version = 11 : i64} {
  func.func @_tv_kernel(%arg0: i32, %arg1: i32, %arg2: memref<8x256xf32, #tpu.memory_space<vmem>>, %arg3: memref<1x1x1xf32, #tpu.memory_space<vmem>>, %arg4: memref<1x1x1xf32, #tpu.memory_space<vmem>>, %arg5: memref<8x128xf32, #tpu.memory_space<vmem>>, %arg6: memref<8x128xf32, #tpu.memory_space<vmem>>) attributes {dimension_semantics = [#tpu.dimension_semantics<parallel>, #tpu.dimension_semantics<arbitrary>], iteration_bounds = array<i64: 1, 1>, scalar_prefetch = 0 : i64, scratch_operands = 2 : i64, tpu.core_type = #tpu.core_type<tc>, window_params = [{transform_indices = @transform_0, window_bounds = array<i64: 8, 256>}, {transform_indices = @transform_1, window_bounds = array<i64: 1, 1, 1>}, {transform_indices = @transform_2, window_bounds = array<i64: 1, 1, 1>}]} {
    %c0_i32 = arith.constant 0 : i32
    %0 = arith.cmpi eq, %arg1, %c0_i32 : i32
    %1 = arith.extui %0 : i1 to i32
    %c0_i32_0 = arith.constant 0 : i32
    %2 = arith.cmpi ne, %1, %c0_i32_0 : i32
    scf.if %2 {
      %cst_18 = arith.constant 0.000000e+00 : f32
      %50 = vector.broadcast %cst_18 : f32 to vector<8x128xf32>
      %c0_19 = arith.constant 0 : index
      %c0_20 = arith.constant 0 : index
      %51 = vector.load %arg5[%c0_19, %c0_20] : memref<8x128xf32, #tpu.memory_space<vmem>>, vector<8x128xf32>
      tpu.vector_store %arg5[%c0_19, %c0_20], %50 {strides = array<i32>} : memref<8x128xf32, #tpu.memory_space<vmem>>, vector<8x128xf32>,
      %cst_21 = arith.constant 0.000000e+00 : f32
      %52 = vector.broadcast %cst_21 : f32 to vector<8x128xf32>
      %c0_22 = arith.constant 0 : index
      %c0_23 = arith.constant 0 : index
      %53 = vector.load %arg6[%c0_22, %c0_23] : memref<8x128xf32, #tpu.memory_space<vmem>>, vector<8x128xf32>
      tpu.vector_store %arg6[%c0_22, %c0_23], %52 {strides = array<i32>} : memref<8x128xf32, #tpu.memory_space<vmem>>, vector<8x128xf32>,
    } else {
    }
    %c0 = arith.constant 0 : index
    %c0_1 = arith.constant 0 : index
    %3 = vector.load %arg2[%c0, %c0_1] : memref<8x256xf32, #tpu.memory_space<vmem>>, vector<8x256xf32>
    %4 = tpu.iota {dimensions = array<i32: 1>} : vector<8x256xi32>
    %c240_i32 = arith.constant 240 : i32
    %5 = tpu.dynamic_rotate %3 by %c240_i32 dim 1 : vector<8x256xf32>, i32 -> vector<8x256xf32>
    %c240_i32_2 = arith.constant 240 : i32
    %6 = vector.broadcast %c240_i32_2 : i32 to vector<8x256xi32>
    %7 = arith.cmpi slt, %4, %6 : vector<8x256xi32>
    %8 = arith.subf %5, %3 : vector<8x256xf32>
    %cst = arith.constant 0.000000e+00 : f32
    %9 = vector.broadcast %cst : f32 to vector<8x256xf32>
    %10 = arith.select %7, %8, %9 : vector<8x256xi1>, vector<8x256xf32>
    %c255_i32 = arith.constant 255 : i32
    %11 = tpu.dynamic_rotate %3 by %c255_i32 dim 1 : vector<8x256xf32>, i32 -> vector<8x256xf32>
    %c16_i32 = arith.constant 16 : i32
    %c0_i32_3 = arith.constant 0 : i32
    %12 = arith.cmpi eq, %c16_i32, %c0_i32_3 : i32
    %c1_i32 = arith.constant 1 : i32
    %13 = arith.select %12, %c1_i32, %c16_i32 : i32
    %14 = vector.broadcast %13 : i32 to vector<8x256xi32>
    %15 = arith.remsi %4, %14 : vector<8x256xi32>
    %c0_i32_4 = arith.constant 0 : i32
    %16 = vector.broadcast %c0_i32_4 : i32 to vector<8x256xi32>
    %17 = arith.cmpi ne, %15, %16 : vector<8x256xi32>
    %c0_i32_5 = arith.constant 0 : i32
    %18 = vector.broadcast %c0_i32_5 : i32 to vector<8x256xi32>
    %19 = arith.cmpi slt, %15, %18 : vector<8x256xi32>
    %c0_i32_6 = arith.constant 0 : i32
    %20 = arith.cmpi slt, %13, %c0_i32_6 : i32
    %21 = vector.broadcast %20 : i1 to vector<8x256xi1>
    %22 = vector.broadcast %21 : vector<8x256xi1> to vector<8x256xi1>
    %23 = arith.xori %19, %22 : vector<8x256xi1>
    %24 = arith.andi %23, %17 : vector<8x256xi1>
    %25 = vector.broadcast %13 : i32 to vector<8x256xi32>
    %26 = arith.addi %15, %25 : vector<8x256xi32>
    %27 = arith.select %24, %26, %15 : vector<8x256xi1>, vector<8x256xi32>
    %c15_i32 = arith.constant 15 : i32
    %28 = vector.broadcast %c15_i32 : i32 to vector<8x256xi32>
    %29 = arith.cmpi ne, %27, %28 : vector<8x256xi32>
    %30 = arith.subf %11, %3 : vector<8x256xf32>
    %cst_7 = arith.constant 0.000000e+00 : f32
    %31 = vector.broadcast %cst_7 : f32 to vector<8x256xf32>
    %32 = arith.select %29, %30, %31 : vector<8x256xi1>, vector<8x256xf32>
    %c0_8 = arith.constant 0 : index
    %c0_9 = arith.constant 0 : index
    %33 = vector.load %arg5[%c0_8, %c0_9] : memref<8x128xf32, #tpu.memory_space<vmem>>, vector<8x128xf32>
    %34 = arith.mulf %10, %10 : vector<8x256xf32>
    %35 = vector.extract_strided_slice %34 {offsets = [0, 0], sizes = [8, 128], strides = [1, 1]} : vector<8x256xf32> to vector<8x128xf32>
    %36 = vector.extract_strided_slice %34 {offsets = [0, 128], sizes = [8, 128], strides = [1, 1]} : vector<8x256xf32> to vector<8x128xf32>
    %37 = arith.addf %35, %36 : vector<8x128xf32>
    %38 = arith.addf %33, %37 : vector<8x128xf32>
    %c0_10 = arith.constant 0 : index
    %c0_11 = arith.constant 0 : index
    %39 = vector.load %arg5[%c0_10, %c0_11] : memref<8x128xf32, #tpu.memory_space<vmem>>, vector<8x128xf32>
    tpu.vector_store %arg5[%c0_10, %c0_11], %38 {strides = array<i32>} : memref<8x128xf32, #tpu.memory_space<vmem>>, vector<8x128xf32>,
    %c0_12 = arith.constant 0 : index
    %c0_13 = arith.constant 0 : index
    %40 = vector.load %arg6[%c0_12, %c0_13] : memref<8x128xf32, #tpu.memory_space<vmem>>, vector<8x128xf32>
    %41 = arith.mulf %32, %32 : vector<8x256xf32>
    %42 = vector.extract_strided_slice %41 {offsets = [0, 0], sizes = [8, 128], strides = [1, 1]} : vector<8x256xf32> to vector<8x128xf32>
    %43 = vector.extract_strided_slice %41 {offsets = [0, 128], sizes = [8, 128], strides = [1, 1]} : vector<8x256xf32> to vector<8x128xf32>
    %44 = arith.addf %42, %43 : vector<8x128xf32>
    %45 = arith.addf %40, %44 : vector<8x128xf32>
    %c0_14 = arith.constant 0 : index
    %c0_15 = arith.constant 0 : index
    %46 = vector.load %arg6[%c0_14, %c0_15] : memref<8x128xf32, #tpu.memory_space<vmem>>, vector<8x128xf32>
    tpu.vector_store %arg6[%c0_14, %c0_15], %45 {strides = array<i32>} : memref<8x128xf32, #tpu.memory_space<vmem>>, vector<8x128xf32>,
    %c0_i32_16 = arith.constant 0 : i32
    %47 = arith.cmpi eq, %arg1, %c0_i32_16 : i32
    %48 = arith.extui %47 : i1 to i32
    %c0_i32_17 = arith.constant 0 : i32
    %49 = arith.cmpi ne, %48, %c0_i32_17 : i32
    scf.if %49 {
      %c0_18 = arith.constant 0 : index
      %c0_19 = arith.constant 0 : index
      %50 = vector.load %arg5[%c0_18, %c0_19] : memref<8x128xf32, #tpu.memory_space<vmem>>, vector<8x128xf32>
      %51 = vector.shape_cast %50 : vector<8x128xf32> to vector<1x8x128xf32>
      %cst_20 = arith.constant dense<0.000000e+00> : vector<1xf32>
      %52 = vector.multi_reduction <add>, %51, %cst_20 [1, 2] : vector<1x8x128xf32> to vector<1xf32>
      %53 = vector.shape_cast %52 : vector<1xf32> to vector<1x1x1xf32>
      %54 = vector.extract %53[0, 0, 0] : f32 from vector<1x1x1xf32>
      %55 = vector.broadcast %54 : f32 to vector<1x1xf32>
      %c0_21 = arith.constant 0 : index
      %c0_22 = arith.constant 0 : index
      %c0_23 = arith.constant 0 : index
      %56 = vector.load %arg3[%c0_21, %c0_22, %c0_23] : memref<1x1x1xf32, #tpu.memory_space<vmem>>, vector<1x1x1xf32>
      %57 = vector.shape_cast %56 : vector<1x1x1xf32> to vector<1x1xf32>
      %58 = vector.shape_cast %55 : vector<1x1xf32> to vector<1x1x1xf32>
      tpu.vector_store %arg3[%c0_21, %c0_22, %c0_23], %58 {strides = array<i32>} : memref<1x1x1xf32, #tpu.memory_space<vmem>>, vector<1x1x1xf32>,
      %c0_24 = arith.constant 0 : index
      %c0_25 = arith.constant 0 : index
      %59 = vector.load %arg6[%c0_24, %c0_25] : memref<8x128xf32, #tpu.memory_space<vmem>>, vector<8x128xf32>
      %60 = vector.shape_cast %59 : vector<8x128xf32> to vector<1x8x128xf32>
      %cst_26 = arith.constant dense<0.000000e+00> : vector<1xf32>
      %61 = vector.multi_reduction <add>, %60, %cst_26 [1, 2] : vector<1x8x128xf32> to vector<1xf32>
      %62 = vector.shape_cast %61 : vector<1xf32> to vector<1x1x1xf32>
      %63 = vector.extract %62[0, 0, 0] : f32 from vector<1x1x1xf32>
      %64 = vector.broadcast %63 : f32 to vector<1x1xf32>
      %c0_27 = arith.constant 0 : index
      %c0_28 = arith.constant 0 : index
      %c0_29 = arith.constant 0 : index
      %65 = vector.load %arg4[%c0_27, %c0_28, %c0_29] : memref<1x1x1xf32, #tpu.memory_space<vmem>>, vector<1x1x1xf32>
      %66 = vector.shape_cast %65 : vector<1x1x1xf32> to vector<1x1xf32>
      %67 = vector.shape_cast %64 : vector<1x1xf32> to vector<1x1x1xf32>
      tpu.vector_store %arg4[%c0_27, %c0_28, %c0_29], %67 {strides = array<i32>} : memref<1x1x1xf32, #tpu.memory_space<vmem>>, vector<1x1x1xf32>,
    } else {
    }
    return
  }
  func.func @transform_0(%arg0: i32, %arg1: i32) -> (i32, i32) {
    %c1_i32 = arith.constant 1 : i32
    %0 = arith.muli %arg0, %c1_i32 : i32
    %1 = arith.addi %0, %arg1 : i32
    %c0_i32 = arith.constant 0 : i32
    %c0_i32_0 = arith.constant 0 : i32
    return %1, %c0_i32 : i32, i32
  }
  func.func @transform_1(%arg0: i32, %arg1: i32) -> (i32, i32, i32) {
    %c0_i32 = arith.constant 0 : i32
    %c0_i32_0 = arith.constant 0 : i32
    %c0_i32_1 = arith.constant 0 : i32
    return %arg0, %c0_i32, %c0_i32_0 : i32, i32, i32
  }
  func.func @transform_2(%arg0: i32, %arg1: i32) -> (i32, i32, i32) {
    %c0_i32 = arith.constant 0 : i32
    %c0_i32_0 = arith.constant 0 : i32
    %c0_i32_1 = arith.constant 0 : i32
    return %arg0, %c0_i32, %c0_i32_0 : i32, i32, i32
  }
}

</mosaic_0001>

<llo_original>
// kernel: tpu_custom_call.1
$region0: #{tpu_custom_call.1}
  #allocation0 [shape = 'u32[]', space=smem, size = 0x4, offset = 0x4, fixed_abs, tag = 'smem constant byte address 0x4 - core index']
  #allocation1 [shape = 'u32[144,128]{1,0:T(1,128)}', space=vmem, size = 0x12000, scoped, tag = 'internal scratch']
  #allocation2 [shape = 'f32[8,128]{1,0:T(8,128)}', space=vmem, size = 0x1000, scoped, tag = 'scratch operand']
  #allocation3 [shape = 'f32[8,128]{1,0:T(8,128)}', space=vmem, size = 0x1000, scoped, tag = 'scratch operand']
  %s0 = inlined_call_operand.hbm [shape: f32[8,256], index: 0, kind: input, shape index: {}]
  %s1 = inlined_call_operand.hbm [shape: f32[1,1,1], index: 1, kind: output, shape index: {0}]
  %s2 = inlined_call_operand.hbm [shape: f32[1,1,1], index: 2, kind: output, shape index: {1}]
  %3 = xla_tuple %s1, %s2
  %s4 = sld [smem:[#allocation0]]
  $region34: #{tpu_custom_call.1} parent=0
    _
  %s6 = ssub.s32 1, %s4
  %s7 = scalar_select 0, %s6, %s4
  $region1: #{tpu_custom_call.1} parent=0
    #allocation4 [shape = 'u8[8192]{0}', space=vmem, size = 0x2000, scoped, tag = 'input window, operand 0, single buffered']
    #allocation5 [shape = 's32[1]{0}', space=sflag, size = 0x4, scoped, tag = 'scoped memory for tpu_custom_call.1']
    #allocation6 [shape = 's32[1]{0}', space=sflag, size = 0x4, scoped, tag = 'scoped memory for tpu_custom_call.1']
    #allocation7 [shape = 'u8[512]{0}', space=vmem, size = 0x400, scoped, tag = 'output window, operand 0, single buffered']
    #allocation8 [shape = 'u8[512]{0}', space=vmem, size = 0x400, scoped, tag = 'output window, operand 1, single buffered']
    #allocation9 [shape = 's32[1]{0}', space=sflag, size = 0x4, scoped, tag = 'scoped memory for tpu_custom_call.1']
    %8 = vsyncpa [#allocation5], 0
    %9 = vsyncpa [#allocation6], 0
    %10 = vsyncpa [#allocation9], 0
    // Predicated region
    $region2: #{tpu_custom_call.1} parent=1 // pred_check
      _
    $region3: #{tpu_custom_call.1} parent=1 // pred_check_branch
      %12 = sbr.rel (0) target = $region5
    $region4: #{tpu_custom_call.1} parent=1 // pred_region
      %s13 = sadd.s32 0, 0
      %s15 = ssub.s32 256, 256
      %16 = vsyncadd [#allocation5], %s15
      %s17 = smul.addr %s13, 2
      %s18 = smul.addr %s17, 128
      %s19 = scalar_lea.hbm %s0, %s18
      %s21 = sshll.u32 [#allocation4], 4
      %s22 = int_to_ptr.vmem [resolvable:$true] %s21
      %24 = dma.hbm_to_vmem [thread:$0]  %s19, 256, %s22, [#allocation5]
    $region5: #{tpu_custom_call.1} parent=1 // pred_fallthru
      _
    // Predicated region
    $region6: #{tpu_custom_call.1} parent=1 // pred_check
      _
    $region7: #{tpu_custom_call.1} parent=1 // pred_check_branch
      %26 = sbr.rel (0) target = $region9
    $region8: #{tpu_custom_call.1} parent=1 // pred_region
      %27 = dma.done [#allocation5], 256
    $region9: #{tpu_custom_call.1} parent=1 // pred_fallthru
      _
    %s28 = sadd.s32 0, 0
    %p29 = scmp.eq.s32.totalorder 0, 0
    // Predicated region
    $region10: #{tpu_custom_call.1} parent=1 // pred_check
      %p30 = pneg %p29
    $region11: #{tpu_custom_call.1} parent=1 // pred_check_branch
      %32 = sbr.rel (%p30) target = $region13
    $region12: #{tpu_custom_call.1} parent=1 // pred_region
      %33 = vst [vmem:[#allocation2] sm:$0xff] 0.0
      %34 = vst [vmem:[#allocation3] sm:$0xff] 0.0
    $region13: #{tpu_custom_call.1} parent=1 // pred_fallthru
      _
    %v35 = vld [vmem:[#allocation4] sm:$0xff]
    %v36 = vld [vmem:[#allocation4 + $0x8] sm:$0xff]
    %v37 = vlaneseq
    %v38 = vand.u32 %v37, 127
    %v39 = vadd.s32 %v38, 128
    %40 = vrot.lane.b32.xlu0 %v35, 112
    %v41 = vpop.permute.xlu0 %40
    %42 = vrot.lane.b32.xlu0 %v36, 112
    %v43 = vpop.permute.xlu0 %42
    %vm44 = vcmp.lt.s32.totalorder %v38, 112
    %v45 = vsel %vm44, %v41, %v43
    %v46 = vsel %vm44, %v43, %v41
    %vm47 = vcmp.lt.s32.totalorder %v38, 240
    %vm48 = vcmp.lt.s32.totalorder %v39, 240
    %v49 = vsub.f32 %v45, %v35
    %v50 = vsub.f32 %v46, %v36
    %v51 = vsel %vm47, %v49, 0.0
    %v52 = vsel %vm48, %v50, 0.0
    %53 = vrot.lane.b32.xlu0 %v35, 127
    %v54 = vpop.permute.xlu0 %53
    %55 = vrot.lane.b32.xlu0 %v36, 127
    %v56 = vpop.permute.xlu0 %55
    %vm57 = vcmp.lt.s32.totalorder %v38, 127
    %v58 = vsel %vm57, %v54, %v56
    %v59 = vsel %vm57, %v56, %v54
    %vm60 = vcmp.lt.s32.totalorder %v38, 0
    %v61 = vsub.s32 0, %v38
    %v62 = vsel %vm60, %v61, %v38
    %v63 = vshrl.u32 %v62, 4
    %v64 = vand.u32 %v62, 15
    %v65 = vsub.s32 0, %v64
    %v66 = vsel %vm60, %v65, %v64
    %vm67 = vcmp.lt.s32.totalorder %v39, 0
    %v68 = vsub.s32 0, %v39
    %v69 = vsel %vm67, %v68, %v39
    %v70 = vshrl.u32 %v69, 4
    %v71 = vand.u32 %v69, 15
    %v72 = vsub.s32 0, %v71
    %v73 = vsel %vm67, %v72, %v71
    %vm74 = vcmp.ne.s32.totalorder %v66, 0
    %vm75 = vcmp.ne.s32.totalorder %v73, 0
    %vm76 = vcmp.lt.s32.totalorder %v66, 0
    %vm77 = vcmp.lt.s32.totalorder %v73, 0
    %vm78 = vmand %vm76, %vm74
    %vm79 = vmand %vm77, %vm75
    %v80 = vadd.s32 %v66, 16
    %v81 = vadd.s32 %v73, 16
    %v82 = vsel %vm78, %v80, %v66
    %v83 = vsel %vm79, %v81, %v73
    %vm84 = vcmp.ne.s32.totalorder %v82, 15
    %vm85 = vcmp.ne.s32.totalorder %v83, 15
    %v86 = vsub.f32 %v58, %v35
    %v87 = vsub.f32 %v59, %v36
    %v88 = vsel %vm84, %v86, 0.0
    %v89 = vsel %vm85, %v87, 0.0
    %v90 = vld [vmem:[#allocation2] sm:$0xff]
    %v91 = vmul.f32 %v51, %v51
    %v92 = vmul.f32 %v52, %v52
    %v93 = vadd.f32 %v91, %v92
    %v94 = vadd.f32 %v90, %v93
    %95 = vst [vmem:[#allocation2] sm:$0xff] %v94
    %v96 = vld [vmem:[#allocation3] sm:$0xff]
    %v97 = vmul.f32 %v88, %v88
    %v98 = vmul.f32 %v89, %v89
    %v99 = vadd.f32 %v97, %v98
    %v100 = vadd.f32 %v96, %v99
    %101 = vst [vmem:[#allocation3] sm:$0xff] %v100
    // Predicated region
    $region14: #{tpu_custom_call.1} parent=1 // pred_check
      %p102 = pneg %p29
    $region15: #{tpu_custom_call.1} parent=1 // pred_check_branch
      %104 = sbr.rel (%p102) target = $region17
    $region16: #{tpu_custom_call.1} parent=1 // pred_region
      %v105 = vld [vmem:[#allocation2] sm:$0xff]
      %106 = vadd.xlane.f32.xlu0 %v105
      %v107 = vpop.xlane.xlu0 %106
      %v108 = vrot.slane %v107, 4
      %v109 = vadd.f32 %v107, %v108
      %v110 = vrot.slane %v109, 2
      %v111 = vadd.f32 %v109, %v110
      %v112 = vrot.slane %v111, 1
      %v113 = vadd.f32 %v111, %v112
      %s114 = vtos %v113
      %v115 = vstv %s114
      %vm116 = vcmask 0
      %117 = vst.msk [vmem:[#allocation7] sm:$0x1] %vm116, %v115
      %v118 = vld [vmem:[#allocation3] sm:$0xff]
      %119 = vadd.xlane.f32.xlu0 %v118
      %v120 = vpop.xlane.xlu0 %119
      %v121 = vrot.slane %v120, 4
      %v122 = vadd.f32 %v120, %v121
      %v123 = vrot.slane %v122, 2
      %v124 = vadd.f32 %v122, %v123
      %v125 = vrot.slane %v124, 1
      %v126 = vadd.f32 %v124, %v125
      %s127 = vtos %v126
      %v128 = vstv %s127
      %129 = vst.msk [vmem:[#allocation8] sm:$0x1] %vm116, %v128
    $region17: #{tpu_custom_call.1} parent=1 // pred_fallthru
      _
    // Predicated region
    $region18: #{tpu_custom_call.1} parent=1 // pred_check
      _
    $region19: #{tpu_custom_call.1} parent=1 // pred_check_branch
      %131 = sbr.rel (0) target = $region21
    $region20: #{tpu_custom_call.1} parent=1 // pred_region
      %s133 = ssub.s32 16, 16
      %134 = vsyncadd [#allocation6], %s133
      %s136 = sshll.u32 [#allocation7], 4
      %s137 = int_to_ptr.vmem [resolvable:$true] %s136
      %139 = dma.vmem_to_hbm [thread:$0]  %s137, 16, %s1, [#allocation6]
    $region21: #{tpu_custom_call.1} parent=1 // pred_fallthru
      _
    // Predicated region
    $region22: #{tpu_custom_call.1} parent=1 // pred_check
      _
    $region23: #{tpu_custom_call.1} parent=1 // pred_check_branch
      %141 = sbr.rel (0) target = $region25
    $region24: #{tpu_custom_call.1} parent=1 // pred_region
      %s143 = ssub.s32 16, 16
      %144 = vsyncadd [#allocation9], %s143
      %s146 = sshll.u32 [#allocation8], 4
      %s147 = int_to_ptr.vmem [resolvable:$true] %s146
      %149 = dma.vmem_to_hbm [thread:$0]  %s147, 16, %s2, [#allocation9]
    $region25: #{tpu_custom_call.1} parent=1 // pred_fallthru
      _
    // Predicated region
    $region26: #{tpu_custom_call.1} parent=1 // pred_check
      _
    $region27: #{tpu_custom_call.1} parent=1 // pred_check_branch
      %151 = sbr.rel (0) target = $region29
    $region28: #{tpu_custom_call.1} parent=1 // pred_region
      %152 = dma.done [#allocation6], 16
    $region29: #{tpu_custom_call.1} parent=1 // pred_fallthru
      _
    // Predicated region
    $region30: #{tpu_custom_call.1} parent=1 // pred_check
      _
    $region31: #{tpu_custom_call.1} parent=1 // pred_check_branch
      %154 = sbr.rel (0) target = $region33
    $region32: #{tpu_custom_call.1} parent=1 // pred_region
      %155 = dma.done [#allocation9], 16
    $region33: #{tpu_custom_call.1} parent=1 // pred_fallthru
      _
    %156 = vsyncpa [#allocation5], 1
    %157 = vsyncpa [#allocation6], 1
    %158 = vsyncpa [#allocation9], 1

</llo_original>
